<compile_context>
chip_gen: v7x
topology: tpu7x:2x2x1
jax: 0.10.0
libtpu: 0.0.40
codegen_flags: <defaults>
</compile_context>

<pallas_src>
import jax
import jax.numpy as jnp
from jax.experimental import pallas as pl
from jax.experimental.pallas import tpu as pltpu

C_IN = 369   # encoder in channels
C_MID = 123  # encoder out / decoder in channels
C_OUT = 369  # decoder out channels


def _round_up(x, m):
    return pl.cdiv(x, m) * m


def _simple_model_kernel(x_ref, we_ref, be_ref, wd_ref, bd_ref, o_ref):
    # x_ref:  (C_IN,  tile_p) f32    we_ref: (C_MID, C_IN)  bf16   be_ref: (C_MID, 1) f32
    # wd_ref: (C_OUT, C_MID)  bf16   bd_ref: (C_OUT, 1) f32        o_ref:  (C_OUT, tile_p) f32
    x = x_ref[...].astype(jnp.bfloat16)                                  # bf16 MXU operand
    # encoder: 1x1 Conv2d(369 -> 123) == We @ X  (per-pixel matmul), f32 accumulation
    h = jnp.dot(we_ref[...], x, preferred_element_type=jnp.float32)      # (C_MID, tile_p)
    h = h + be_ref[...]
    # decoder: 1x1 ConvTranspose2d(123 -> 369) == Wd^T @ H, f32 accumulation
    y = jnp.dot(wd_ref[...], h.astype(jnp.bfloat16),
                preferred_element_type=jnp.float32)                      # (C_OUT, tile_p)
    y = y + bd_ref[...]
    o_ref[...] = y.astype(o_ref.dtype)


def simple_model_pallas(x, w_enc, b_enc, w_dec, b_dec, *, tile_p_max=1024):
    """x: (N, C_IN, H, W) float32.
    w_enc: (C_MID, C_IN) -- torch Conv2d weight squeezed (out, in).
    b_enc: (C_MID,)
    w_dec: (C_MID, C_OUT) -- torch ConvTranspose2d weight squeezed (in, out).
    b_dec: (C_OUT,)
    returns (N, C_OUT, H, W)
    """
    n, c, h, w = x.shape
    assert c == C_IN
    hw = h * w

    # NCHW -> (N, C_IN, H*W): pure view, no transpose (pixels become the lane axis).
    x3 = x.reshape(n, C_IN, hw)

    # Pixel tile: multiple of 128 lanes, capped at tile_p_max (VMEM budget
    # ~10 MB at 1024 f32 -- fits v5e/v6e/v7x scoped VMEM with headroom).
    tile_p = int(min(tile_p_max, _round_up(hw, 128)))
    hw_pad = int(_round_up(hw, tile_p))
    if hw_pad != hw:
        x3 = jnp.pad(x3, ((0, 0), (0, 0), (0, hw_pad - hw)))

    # Weights in (out, in) orientation for left-multiplication; cast once to bf16.
    we = w_enc.astype(jnp.bfloat16)                    # (C_MID, C_IN)
    wd = jnp.transpose(w_dec).astype(jnp.bfloat16)     # (C_OUT, C_MID)
    be = b_enc.reshape(C_MID, 1).astype(jnp.float32)   # column bias, broadcasts over lanes
    bd = b_dec.reshape(C_OUT, 1).astype(jnp.float32)

    grid = (n, hw_pad // tile_p)
    out3 = pl.pallas_call(
        _simple_model_kernel,
        out_shape=jax.ShapeDtypeStruct((n, C_OUT, hw_pad), x.dtype),
        grid_spec=pltpu.PrefetchScalarGridSpec(
            num_scalar_prefetch=0,
            grid=grid,
            in_specs=[
                pl.BlockSpec((None, C_IN, tile_p), lambda b, p: (b, 0, p)),
                pl.BlockSpec((C_MID, C_IN), lambda b, p: (0, 0)),
                pl.BlockSpec((C_MID, 1), lambda b, p: (0, 0)),
                pl.BlockSpec((C_OUT, C_MID), lambda b, p: (0, 0)),
                pl.BlockSpec((C_OUT, 1), lambda b, p: (0, 0)),
            ],
            out_specs=pl.BlockSpec((None, C_OUT, tile_p), lambda b, p: (b, 0, p)),
        ),
        compiler_params=pltpu.CompilerParams(
            dimension_semantics=("parallel", "parallel"),  # shards across v7x's 2 TCs
            vmem_limit_bytes=32 * 1024 * 1024,             # above v5e's 16 MiB default
        ),
    )(x3, we, be, wd, bd)

    if hw_pad != hw:
        out3 = out3[:, :, :hw]
    return out3.reshape(n, C_OUT, h, w)   # already NCHW; no transpose needed


def init_params(key):
    """Deterministic init mimicking torch's default uniform(-1/sqrt(fan_in), +)."""
    k1, k2, k3, k4 = jax.random.split(key, 4)
    bound_e = 1.0 / jnp.sqrt(jnp.float32(C_IN))   # Conv2d fan_in = 369*1*1
    bound_d = 1.0 / jnp.sqrt(jnp.float32(C_MID))  # ConvT fan_in = 123*1*1
    w_enc = jax.random.uniform(k1, (C_MID, C_IN), jnp.float32, -bound_e, bound_e)
    b_enc = jax.random.uniform(k2, (C_MID,), jnp.float32, -bound_e, bound_e)
    w_dec = jax.random.uniform(k3, (C_MID, C_OUT), jnp.float32, -bound_d, bound_d)
    b_dec = jax.random.uniform(k4, (C_OUT,), jnp.float32, -bound_d, bound_d)
    return w_enc, b_enc, w_dec, b_dec


if __name__ == "__main__":
    key = jax.random.PRNGKey(0)
    kx, kp = jax.random.split(key)
    # small but consistent shapes: batch=2, channels=369 (module requirement), spatial=8
    N, H, W = 2, 8, 8
    x = jax.random.normal(kx, (N, C_IN, H, W), jnp.float32)
    w_enc, b_enc, w_dec, b_dec = init_params(kp)

    y = simple_model_pallas(x, w_enc, b_enc, w_dec, b_dec)
    y = jax.block_until_ready(y)
    assert y.shape == (N, C_OUT, H, W)

    # Reference 1: same math path as the kernel (bf16 operands, f32 accumulation).
    x3 = x.reshape(N, C_IN, H * W)
    h_ref = jnp.einsum(
        "oc,ncp->nop", w_enc.astype(jnp.bfloat16), x3.astype(jnp.bfloat16),
        preferred_element_type=jnp.float32) + b_enc.reshape(1, C_MID, 1)
    y_ref = jnp.einsum(
        "oc,ncp->nop", w_dec.T.astype(jnp.bfloat16), h_ref.astype(jnp.bfloat16),
        preferred_element_type=jnp.float32) + b_dec.reshape(1, C_OUT, 1)
    y_ref = y_ref.reshape(N, C_OUT, H, W)
    assert jnp.allclose(y, y_ref, atol=1e-2, rtol=1e-2)

    # Reference 2: full-f32 PyTorch-equivalent math (loose tolerance for bf16 operands).
    h32 = jnp.einsum("oc,ncp->nop", w_enc, x3) + b_enc.reshape(1, C_MID, 1)
    y32 = jnp.einsum("oc,ncp->nop", w_dec.T, h32) + b_dec.reshape(1, C_OUT, 1)
    y32 = y32.reshape(N, C_OUT, H, W)
    assert jnp.allclose(y, y32, atol=5e-2, rtol=5e-2)

    print("KERNEL_OK")
</pallas_src>

<mosaic_0001>
module attributes {stable_mosaic.version = 11 : i64} {
  func.func @_simple_model_kernel(%arg0: i32, %arg1: i32, %arg2: memref<1x369x128xf32, #tpu.memory_space<vmem>>, %arg3: memref<123x369xbf16, #tpu.memory_space<vmem>>, %arg4: memref<123x1xf32, #tpu.memory_space<vmem>>, %arg5: memref<369x123xbf16, #tpu.memory_space<vmem>>, %arg6: memref<369x1xf32, #tpu.memory_space<vmem>>, %arg7: memref<1x369x128xf32, #tpu.memory_space<vmem>>) attributes {dimension_semantics = [#tpu.dimension_semantics<parallel>, #tpu.dimension_semantics<parallel>], iteration_bounds = array<i64: 2, 1>, scalar_prefetch = 0 : i64, scratch_operands = 0 : i64, tpu.core_type = #tpu.core_type<tc>, window_params = [{transform_indices = @transform_0, window_bounds = array<i64: 1, 369, 128>}, {pipeline_mode = #tpu.pipeline_mode<synchronous>, transform_indices = @transform_1, window_bounds = array<i64: 123, 369>}, {pipeline_mode = #tpu.pipeline_mode<synchronous>, transform_indices = @transform_2, window_bounds = array<i64: 123, 1>}, {pipeline_mode = #tpu.pipeline_mode<synchronous>, transform_indices = @transform_3, window_bounds = array<i64: 369, 123>}, {pipeline_mode = #tpu.pipeline_mode<synchronous>, transform_indices = @transform_4, window_bounds = array<i64: 369, 1>}, {transform_indices = @transform_5, window_bounds = array<i64: 1, 369, 128>}]} {
    %c0 = arith.constant 0 : index
    %c0_0 = arith.constant 0 : index
    %c0_1 = arith.constant 0 : index
    %0 = vector.load %arg2[%c0, %c0_0, %c0_1] : memref<1x369x128xf32, #tpu.memory_space<vmem>>, vector<1x369x128xf32>
    %1 = vector.shape_cast %0 : vector<1x369x128xf32> to vector<369x128xf32>
    %2 = arith.truncf %1 : vector<369x128xf32> to vector<369x128xbf16>
    %c0_2 = arith.constant 0 : index
    %c0_3 = arith.constant 0 : index
    %3 = vector.load %arg3[%c0_2, %c0_3] : memref<123x369xbf16, #tpu.memory_space<vmem>>, vector<123x369xbf16>
    %cst = arith.constant dense<0.000000e+00> : vector<123x128xf32>
    %4 = tpu.matmul %3, %2, %cst {dimension_numbers = #tpu.dot_dimension_numbers<[1], [0], [0], [1], [0, 0, 1, 1], [], []>} : vector<123x369xbf16>, vector<369x128xbf16>, vector<123x128xf32> -> vector<123x128xf32>
    %c0_4 = arith.constant 0 : index
    %c0_5 = arith.constant 0 : index
    %5 = vector.load %arg4[%c0_4, %c0_5] : memref<123x1xf32, #tpu.memory_space<vmem>>, vector<123x1xf32>
    %6 = vector.broadcast %5 : vector<123x1xf32> to vector<123x128xf32>
    %7 = arith.addf %4, %6 : vector<123x128xf32>
    %c0_6 = arith.constant 0 : index
    %c0_7 = arith.constant 0 : index
    %8 = vector.load %arg5[%c0_6, %c0_7] : memref<369x123xbf16, #tpu.memory_space<vmem>>, vector<369x123xbf16>
    %9 = arith.truncf %7 : vector<123x128xf32> to vector<123x128xbf16>
    %cst_8 = arith.constant dense<0.000000e+00> : vector<369x128xf32>
    %10 = tpu.matmul %8, %9, %cst_8 {dimension_numbers = #tpu.dot_dimension_numbers<[1], [0], [0], [1], [0, 0, 1, 1], [], []>} : vector<369x123xbf16>, vector<123x128xbf16>, vector<369x128xf32> -> vector<369x128xf32>
    %c0_9 = arith.constant 0 : index
    %c0_10 = arith.constant 0 : index
    %11 = vector.load %arg6[%c0_9, %c0_10] : memref<369x1xf32, #tpu.memory_space<vmem>>, vector<369x1xf32>
    %12 = vector.broadcast %11 : vector<369x1xf32> to vector<369x128xf32>
    %13 = arith.addf %10, %12 : vector<369x128xf32>
    %c0_11 = arith.constant 0 : index
    %c0_12 = arith.constant 0 : index
    %c0_13 = arith.constant 0 : index
    %14 = vector.load %arg7[%c0_11, %c0_12, %c0_13] : memref<1x369x128xf32, #tpu.memory_space<vmem>>, vector<1x369x128xf32>
    %15 = vector.shape_cast %14 : vector<1x369x128xf32> to vector<369x128xf32>
    %16 = vector.shape_cast %13 : vector<369x128xf32> to vector<1x369x128xf32>
    tpu.vector_store %arg7[%c0_11, %c0_12, %c0_13], %16 {strides = array<i32>} : memref<1x369x128xf32, #tpu.memory_space<vmem>>, vector<1x369x128xf32>,
    return
  }
  func.func @transform_0(%arg0: i32, %arg1: i32) -> (i32, i32, i32) {
    %c0_i32 = arith.constant 0 : i32
    %c0_i32_0 = arith.constant 0 : i32
    return %arg0, %c0_i32, %arg1 : i32, i32, i32
  }
  func.func @transform_1(%arg0: i32, %arg1: i32) -> (i32, i32) {
    %c0_i32 = arith.constant 0 : i32
    %c0_i32_0 = arith.constant 0 : i32
    %c0_i32_1 = arith.constant 0 : i32
    return %c0_i32, %c0_i32_0 : i32, i32
  }
  func.func @transform_2(%arg0: i32, %arg1: i32) -> (i32, i32) {
    %c0_i32 = arith.constant 0 : i32
    %c0_i32_0 = arith.constant 0 : i32
    %c0_i32_1 = arith.constant 0 : i32
    return %c0_i32, %c0_i32_0 : i32, i32
  }
  func.func @transform_3(%arg0: i32, %arg1: i32) -> (i32, i32) {
    %c0_i32 = arith.constant 0 : i32
    %c0_i32_0 = arith.constant 0 : i32
    %c0_i32_1 = arith.constant 0 : i32
    return %c0_i32, %c0_i32_0 : i32, i32
  }
  func.func @transform_4(%arg0: i32, %arg1: i32) -> (i32, i32) {
    %c0_i32 = arith.constant 0 : i32
    %c0_i32_0 = arith.constant 0 : i32
    %c0_i32_1 = arith.constant 0 : i32
    return %c0_i32, %c0_i32_0 : i32, i32
  }
  func.func @transform_5(%arg0: i32, %arg1: i32) -> (i32, i32, i32) {
    %c0_i32 = arith.constant 0 : i32
    %c0_i32_0 = arith.constant 0 : i32
    return %arg0, %c0_i32, %arg1 : i32, i32, i32
  }
}

</mosaic_0001>

<llo_original>
// kernel: tpu_custom_call.1
$region0: #{tpu_custom_call.1}
  #allocation0 [shape = 'u32[]', space=smem, size = 0x4, offset = 0x4, fixed_abs, tag = 'smem constant byte address 0x4 - core index']
  #allocation1 [shape = 'u32[144,128]{1,0:T(1,128)}', space=vmem, size = 0x12000, scoped, tag = 'internal scratch']
  %s0 = inlined_call_operand.vmem [shape: f32[2,369,128], index: 0, kind: input, shape index: {}]
  %s1 = inlined_call_operand.vmem [shape: bf16[123,369], index: 1, kind: input, shape index: {}]
  %s2 = inlined_call_operand.vmem [shape: f32[123,1], index: 2, kind: input, shape index: {}]
  %s3 = inlined_call_operand.vmem [shape: bf16[369,123], index: 3, kind: input, shape index: {}]
  %s4 = inlined_call_operand.vmem [shape: f32[369,1], index: 4, kind: input, shape index: {}]
  %s5 = inlined_call_operand.vmem [shape: f32[2,369,128], index: 5, kind: output, shape index: {}]
  %s6 = sld [smem:[#allocation0]]
  $region53: #{tpu_custom_call.1} parent=0
    _
  %s8 = ssub.s32 1, %s6
  %s9 = scalar_select 0, %s8, %s6
  loop: start=0, step=1, limit=4
  $region2: #{tpu_custom_call.1} parent=0 // loop_pre_header
    _
  $region3: #{tpu_custom_call.1} parent=0 // loop_header
    %s11 = sphi 0, %s15
    %p12 = scmp.ge.s32.totalorder %s11, 4
    %s18 = sphi 0, %s30
    %s19 = sphi 0, %s26
    %s20 = sphi 0, %s18
    %s21 = sphi 0, %s19
    %s22 = sphi 0, %s20
    %s23 = sphi 0, %s21
    %s35 = sphi 0, %s37
    %s38 = sphi 0, %s35
    %s39 = sphi 0, %s38
    %s55 = sphi 0, %s39
    %s59 = sphi 0, %s59
    %s61 = sphi 0, %s59
    %s62 = sphi 0, %s61
    %s76 = sphi 0, %s62
    %s80 = sphi 0, %s80
    %s82 = sphi 0, %s80
    %s83 = sphi 0, %s82
    %s97 = sphi 0, %s83
    %s101 = sphi 0, %s101
    %s103 = sphi 0, %s101
    %s104 = sphi 0, %s103
    %s118 = sphi 0, %s104
    %s122 = sphi 0, %s122
    %s124 = sphi 0, %s122
    %s125 = sphi 0, %s124
    %s139 = sphi 0, %s125
    %s147 = sphi 0, %s149
    %s150 = sphi 0, %s147
    %s151 = sphi 0, %s150
    %s167 = sphi 0, %s151
  $region4: #{tpu_custom_call.1} parent=0 // loop_header_branch
    %14 = sbr.rel (%p12) target = $region8
  $region5: #{tpu_custom_call.1} parent=0 // loop_body
    %s16 = ssub.s32 %s11, 1
    %s17 = ssub.s32 %s11, 2
    %s24 = sadd.s32 1, %s19
    %p25 = scmp.ge.s32.totalorder %s24, 1
    %s26 = scalar_select %p25, 0, %s24
    %s27 = sadd.s32 1, %s18
    %s28 = scalar_select %p25, %s27, %s18
    %p29 = scmp.ge.s32.totalorder %s28, 2
    %s30 = scalar_select %p29, 0, %s28
    %s31 = ssub.s32 %s18, %s30
    %s32 = ssub.s32 %s19, %s26
    %s33 = sor.u32 %s31, %s32
    %p34 = scmp.eq.s32.totalorder %s33, 0
    %s36 = sadd.s32 %s35, 1
    %s37 = scalar_select %p34, %s35, %s36
    %p40 = pneg %p34
    %p41 = scmp.eq.s32.totalorder %s11, 1
    %p42 = por %p40, %p41
    %p43 = scmp.ne.s32.totalorder %s35, %s38
    %p44 = scmp.eq.s32.totalorder %s11, 0
    %p45 = por %p43, %p44
    %p46 = scmp.ne.s32.totalorder %s35, %s38
    %p47 = scmp.eq.s32.totalorder %s16, 1
    %p48 = por %p46, %p47
    %p49 = scmp.ne.s32.totalorder %s38, %s39
    %p50 = scmp.eq.s32.totalorder %s16, 0
    %p51 = por %p49, %p50
    %p52 = scmp.ne.s32.totalorder %s38, %s39
    %p53 = scmp.eq.s32.totalorder %s17, 1
    %p54 = por %p52, %p53
    %p56 = scmp.ne.s32.totalorder %s39, %s55
    %p57 = scmp.eq.s32.totalorder %s17, 0
    %p58 = por %p56, %p57
    %s60 = sadd.s32 %s59, 1
    %p63 = scmp.eq.s32.totalorder %s11, 1
    %p64 = scmp.ne.s32.totalorder %s59, %s61
    %p65 = scmp.eq.s32.totalorder %s11, 0
    %p66 = por %p64, %p65
    %p67 = scmp.ne.s32.totalorder %s59, %s61
    %p68 = scmp.eq.s32.totalorder %s16, 1
    %p69 = por %p67, %p68
    %p70 = scmp.ne.s32.totalorder %s61, %s62
    %p71 = scmp.eq.s32.totalorder %s16, 0
    %p72 = por %p70, %p71
    %p73 = scmp.ne.s32.totalorder %s61, %s62
    %p74 = scmp.eq.s32.totalorder %s17, 1
    %p75 = por %p73, %p74
    %p77 = scmp.ne.s32.totalorder %s62, %s76
    %p78 = scmp.eq.s32.totalorder %s17, 0
    %p79 = por %p77, %p78
    %s81 = sadd.s32 %s80, 1
    %p84 = scmp.eq.s32.totalorder %s11, 1
    %p85 = scmp.ne.s32.totalorder %s80, %s82
    %p86 = scmp.eq.s32.totalorder %s11, 0
    %p87 = por %p85, %p86
    %p88 = scmp.ne.s32.totalorder %s80, %s82
    %p89 = scmp.eq.s32.totalorder %s16, 1
    %p90 = por %p88, %p89
    %p91 = scmp.ne.s32.totalorder %s82, %s83
    %p92 = scmp.eq.s32.totalorder %s16, 0
    %p93 = por %p91, %p92
    %p94 = scmp.ne.s32.totalorder %s82, %s83
    %p95 = scmp.eq.s32.totalorder %s17, 1
    %p96 = por %p94, %p95
    %p98 = scmp.ne.s32.totalorder %s83, %s97
    %p99 = scmp.eq.s32.totalorder %s17, 0
    %p100 = por %p98, %p99
    %s102 = sadd.s32 %s101, 1
    %p105 = scmp.eq.s32.totalorder %s11, 1
    %p106 = scmp.ne.s32.totalorder %s101, %s103
    %p107 = scmp.eq.s32.totalorder %s11, 0
    %p108 = por %p106, %p107
    %p109 = scmp.ne.s32.totalorder %s101, %s103
    %p110 = scmp.eq.s32.totalorder %s16, 1
    %p111 = por %p109, %p110
    %p112 = scmp.ne.s32.totalorder %s103, %s104
    %p113 = scmp.eq.s32.totalorder %s16, 0
    %p114 = por %p112, %p113
    %p115 = scmp.ne.s32.totalorder %s103, %s104
    %p116 = scmp.eq.s32.totalorder %s17, 1
    %p117 = por %p115, %p116
    %p119 = scmp.ne.s32.totalorder %s104, %s118
    %p120 = scmp.eq.s32.totalorder %s17, 0
    %p121 = por %p119, %p120
    %s123 = sadd.s32 %s122, 1
    %p126 = scmp.eq.s32.totalorder %s11, 1
    %p127 = scmp.ne.s32.totalorder %s122, %s124
    %p128 = scmp.eq.s32.totalorder %s11, 0
    %p129 = por %p127, %p128
    %p130 = scmp.ne.s32.totalorder %s122, %s124
    %p131 = scmp.eq.s32.totalorder %s16, 1
    %p132 = por %p130, %p131
    %p133 = scmp.ne.s32.totalorder %s124, %s125
    %p134 = scmp.eq.s32.totalorder %s16, 0
    %p135 = por %p133, %p134
    %p136 = scmp.ne.s32.totalorder %s124, %s125
    %p137 = scmp.eq.s32.totalorder %s17, 1
    %p138 = por %p136, %p137
    %p140 = scmp.ne.s32.totalorder %s125, %s139
    %p141 = scmp.eq.s32.totalorder %s17, 0
    %p142 = por %p140, %p141
    %s143 = ssub.s32 %s18, %s30
    %s144 = ssub.s32 %s19, %s26
    %s145 = sor.u32 %s143, %s144
    %p146 = scmp.eq.s32.totalorder %s145, 0
    %s148 = sadd.s32 %s147, 1
    %s149 = scalar_select %p146, %s147, %s148
    %p152 = pneg %p146
    %p153 = scmp.eq.s32.totalorder %s11, 1
    %p154 = por %p152, %p153
    %p155 = scmp.ne.s32.totalorder %s147, %s150
    %p156 = scmp.eq.s32.totalorder %s11, 0
    %p157 = por %p155, %p156
    %p158 = scmp.ne.s32.totalorder %s147, %s150
    %p159 = scmp.eq.s32.totalorder %s16, 1
    %p160 = por %p158, %p159
    %p161 = scmp.ne.s32.totalorder %s150, %s151
    %p162 = scmp.eq.s32.totalorder %s16, 0
    %p163 = por %p161, %p162
    %p164 = scmp.ne.s32.totalorder %s150, %s151
    %p165 = scmp.eq.s32.totalorder %s17, 1
    %p166 = por %p164, %p165
    %p168 = scmp.ne.s32.totalorder %s151, %s167
    %p169 = scmp.eq.s32.totalorder %s17, 0
    %p170 = por %p168, %p169
    %p171 = scmp.le.s32.totalorder 1, %s11
    %p172 = scmp.lt.s32.totalorder %s11, 3
    %p173 = pnand %p171, %p172
    %p174 = pneg %p173
    // Predicated region
    $region9: #{tpu_custom_call.1} parent=5 // pred_check
      _
    $region10: #{tpu_custom_call.1} parent=5 // pred_check_branch
      %176 = sbr.rel (%p173) target = $region12
    $region11: #{tpu_custom_call.1} parent=5 // pred_region
      %s177 = ssub.s32 %s11, 1
      // Predicated region
      $region13: #{tpu_custom_call.1} parent=11 // pred_check
        %p178 = pneg %p72
      $region14: #{tpu_custom_call.1} parent=11 // pred_check_branch
        %180 = sbr.rel (%p178) target = $region16
      $region15: #{tpu_custom_call.1} parent=11 // pred_region
        _
      $region16: #{tpu_custom_call.1} parent=11 // pred_fallthru
        _
      // Predicated region
      $region17: #{tpu_custom_call.1} parent=11 // pred_check
        %p181 = pneg %p93
      $region18: #{tpu_custom_call.1} parent=11 // pred_check_branch
        %183 = sbr.rel (%p181) target = $region20
      $region19: #{tpu_custom_call.1} parent=11 // pred_region
        _
      $region20: #{tpu_custom_call.1} parent=11 // pred_fallthru
        _
      // Predicated region
      $region21: #{tpu_custom_call.1} parent=11 // pred_check
        %p184 = pneg %p114
      $region22: #{tpu_custom_call.1} parent=11 // pred_check_branch
        %186 = sbr.rel (%p184) target = $region24
      $region23: #{tpu_custom_call.1} parent=11 // pred_region
        _
      $region24: #{tpu_custom_call.1} parent=11 // pred_fallthru
        _
      // Predicated region
      $region25: #{tpu_custom_call.1} parent=11 // pred_check
        %p187 = pneg %p135
      $region26: #{tpu_custom_call.1} parent=11 // pred_check_branch
        %189 = sbr.rel (%p187) target = $region28
      $region27: #{tpu_custom_call.1} parent=11 // pred_region
        _
      $region28: #{tpu_custom_call.1} parent=11 // pred_fallthru
        _
    $region12: #{tpu_custom_call.1} parent=5 // pred_fallthru
      _
    %p190 = scmp.lt.s32.totalorder %s11, 2
    // Predicated region
    $region29: #{tpu_custom_call.1} parent=5 // pred_check
      %p191 = pneg %p190
    $region30: #{tpu_custom_call.1} parent=5 // pred_check_branch
      %193 = sbr.rel (%p191) target = $region32
    $region31: #{tpu_custom_call.1} parent=5 // pred_region
      // Predicated region
      $region33: #{tpu_custom_call.1} parent=31 // pred_check
        %p194 = pneg %p45
      $region34: #{tpu_custom_call.1} parent=31 // pred_check_branch
        %196 = sbr.rel (%p194) target = $region36
      $region35: #{tpu_custom_call.1} parent=31 // pred_region
        %p197 = scmp.lt.s32.totalorder %s18, 1
        %s198 = scalar_select %p197, %s18, 1
        %p199 = scmp.lt.s32.totalorder %s19, 0
        %s200 = scalar_select %p199, %s19, 0
        %s201 = smul.addr %s198, 47
        %s202 = sadd.s32 %s200, %s201
        %s203 = smul.addr %s202, 8
        %s204 = scalar_lea.vmem %s0, %s203
      $region36: #{tpu_custom_call.1} parent=31 // pred_fallthru
        _
    $region32: #{tpu_custom_call.1} parent=5 // pred_fallthru
      _
    %p205 = scmp.le.s32.totalorder 1, %s11
    %p206 = scmp.lt.s32.totalorder %s11, 3
    %p207 = pnand %p205, %p206
    %p208 = pneg %p207
    // Predicated region
    $region37: #{tpu_custom_call.1} parent=5 // pred_check
      _
    $region38: #{tpu_custom_call.1} parent=5 // pred_check_branch
      %210 = sbr.rel (%p207) target = $region40
    $region39: #{tpu_custom_call.1} parent=5 // pred_region
      %s211 = ssub.s32 %s11, 1
      %p212 = scmp.lt.s32.totalorder %s20, 1
      %s213 = scalar_select %p212, %s20, 1
      %p214 = scmp.lt.s32.totalorder %s21, 0
      %s215 = scalar_select %p214, %s21, 0
      %s216 = smul.addr %s213, 47
      %s217 = sadd.s32 %s215, %s216
      %s218 = smul.addr %s217, 8
      %s219 = scalar_lea.vmem %s0, %s218
      %p220 = pneg %p51
      %p221 = pneg %p48
      %p222 = pneg %p72
      %p223 = pneg %p69
      %p224 = pneg %p93
      %p225 = pneg %p90
      %p226 = pneg %p114
      %p227 = pneg %p111
      %p228 = pneg %p135
      %p229 = pneg %p132
      %p230 = pneg %p163
      %p231 = pneg %p160
      %p232 = scmp.lt.s32.totalorder %s20, 1
      %s233 = scalar_select %p232, %s20, 1
      %p234 = scmp.lt.s32.totalorder %s21, 0
      %s235 = scalar_select %p234, %s21, 0
      %s236 = smul.addr %s233, 47
      %s237 = sadd.s32 %s235, %s236
      %s238 = smul.addr %s237, 8
      %s239 = scalar_lea.vmem %s5, %s238
      %p240 = scmp.lt.s32.totalorder %s20, 1
      %s241 = scalar_select %p240, %s20, 1
      %p242 = scmp.lt.s32.totalorder %s21, 0
      %s243 = scalar_select %p242, %s21, 0
      %s244 = smul.addr %s241, 47
      %s245 = sadd.s32 %s243, %s244
      %s246 = smul.addr %s245, 8
      %s247 = scalar_lea.vmem %s0, %s246
      %p248 = scmp.lt.s32.totalorder %s20, 1
      %s249 = scalar_select %p248, %s20, 1
      %p250 = scmp.lt.s32.totalorder %s21, 0
      %s251 = scalar_select %p250, %s21, 0
      %s252 = smul.addr %s249, 47
      %s253 = sadd.s32 %s251, %s252
      %s254 = smul.addr %s253, 8
      %s255 = scalar_lea.vmem %s5, %s254
      %v257 = vld [vmem:[%s247] sm:$0xff]
      %v258 = vld [vmem:[%s247 + $0x8] sm:$0xff]
      %v259 = vld [vmem:[%s247 + $0x10] sm:$0xff]
      %v260 = vld [vmem:[%s247 + $0x18] sm:$0xff]
      %v261 = vld [vmem:[%s247 + $0x20] sm:$0xff]
      %v262 = vld [vmem:[%s247 + $0x28] sm:$0xff]
      %v263 = vld [vmem:[%s247 + $0x30] sm:$0xff]
      %v264 = vld [vmem:[%s247 + $0x38] sm:$0xff]
      %v265 = vld [vmem:[%s247 + $0x40] sm:$0xff]
      %v266 = vld [vmem:[%s247 + $0x48] sm:$0xff]
      %v267 = vld [vmem:[%s247 + $0x50] sm:$0xff]
      %v268 = vld [vmem:[%s247 + $0x58] sm:$0xff]
      %v269 = vld [vmem:[%s247 + $0x60] sm:$0xff]
      %v270 = vld [vmem:[%s247 + $0x68] sm:$0xff]
      %v271 = vld [vmem:[%s247 + $0x70] sm:$0xff]
      %v272 = vld [vmem:[%s247 + $0x78] sm:$0xff]
      %v273 = vld [vmem:[%s247 + $0x80] sm:$0xff]
      %v274 = vld [vmem:[%s247 + $0x88] sm:$0xff]
      %v275 = vld [vmem:[%s247 + $0x90] sm:$0xff]
      %v276 = vld [vmem:[%s247 + $0x98] sm:$0xff]
      %v277 = vld [vmem:[%s247 + $0xa0] sm:$0xff]
      %v278 = vld [vmem:[%s247 + $0xa8] sm:$0xff]
      %v279 = vld [vmem:[%s247 + $0xb0] sm:$0xff]
      %v280 = vld [vmem:[%s247 + $0xb8] sm:$0xff]
      %v281 = vld [vmem:[%s247 + $0xc0] sm:$0xff]
      %v282 = vld [vmem:[%s247 + $0xc8] sm:$0xff]
      %v283 = vld [vmem:[%s247 + $0xd0] sm:$0xff]
      %v284 = vld [vmem:[%s247 + $0xd8] sm:$0xff]
      %v285 = vld [vmem:[%s247 + $0xe0] sm:$0xff]
      %v286 = vld [vmem:[%s247 + $0xe8] sm:$0xff]
      %v287 = vld [vmem:[%s247 + $0xf0] sm:$0xff]
      %v288 = vld [vmem:[%s247 + $0xf8] sm:$0xff]
      %v289 = vld [vmem:[%s247 + $0x100] sm:$0xff]
      %v290 = vld [vmem:[%s247 + $0x108] sm:$0xff]
      %v291 = vld [vmem:[%s247 + $0x110] sm:$0xff]
      %v292 = vld [vmem:[%s247 + $0x118] sm:$0xff]
      %v293 = vld [vmem:[%s247 + $0x120] sm:$0xff]
      %v294 = vld [vmem:[%s247 + $0x128] sm:$0xff]
      %v295 = vld [vmem:[%s247 + $0x130] sm:$0xff]
      %v296 = vld [vmem:[%s247 + $0x138] sm:$0xff]
      %v297 = vld [vmem:[%s247 + $0x140] sm:$0xff]
      %v298 = vld [vmem:[%s247 + $0x148] sm:$0xff]
      %v299 = vld [vmem:[%s247 + $0x150] sm:$0xff]
      %v300 = vld [vmem:[%s247 + $0x158] sm:$0xff]
      %v301 = vld [vmem:[%s247 + $0x160] sm:$0xff]
      %v302 = vld [vmem:[%s247 + $0x168] sm:$0xff]
      %v303 = vld [vmem:[%s247 + $0x170] sm:$0x1]
      %v304 = vpack.c.bf16 %v258, %v257
      %v305 = vpack.c.bf16 %v260, %v259
      %v306 = vpack.c.bf16 %v262, %v261
      %v307 = vpack.c.bf16 %v264, %v263
      %v308 = vpack.c.bf16 %v266, %v265
      %v309 = vpack.c.bf16 %v268, %v267
      %v310 = vpack.c.bf16 %v270, %v269
      %v311 = vpack.c.bf16 %v272, %v271
      %v312 = vpack.c.bf16 %v274, %v273
      %v313 = vpack.c.bf16 %v276, %v275
      %v314 = vpack.c.bf16 %v278, %v277
      %v315 = vpack.c.bf16 %v280, %v279
      %v316 = vpack.c.bf16 %v282, %v281
      %v317 = vpack.c.bf16 %v284, %v283
      %v318 = vpack.c.bf16 %v286, %v285
      %v319 = vpack.c.bf16 %v288, %v287
      %v320 = vpack.c.bf16 %v290, %v289
      %v321 = vpack.c.bf16 %v292, %v291
      %v322 = vpack.c.bf16 %v294, %v293
      %v323 = vpack.c.bf16 %v296, %v295
      %v324 = vpack.c.bf16 %v298, %v297
      %v325 = vpack.c.bf16 %v300, %v299
      %v326 = vpack.c.bf16 %v302, %v301
      %v327 = vpack.c.bf16 %v303, %v303
      %v328 = vld [vmem:[%s1] sm:$0xff]
      %v329 = vld [vmem:[%s1 + $0x8] sm:$0xf]
      %v330 = vld [vmem:[%s1 + $0xc] sm:$0xff]
      %v331 = vld [vmem:[%s1 + $0x14] sm:$0xf]
      %v332 = vld [vmem:[%s1 + $0x18] sm:$0xff]
      %v333 = vld [vmem:[%s1 + $0x20] sm:$0xf]
      %v334 = vld [vmem:[%s1 + $0x24] sm:$0xff]
      %v335 = vld [vmem:[%s1 + $0x2c] sm:$0xf]
      %v336 = vld [vmem:[%s1 + $0x30] sm:$0xff]
      %v337 = vld [vmem:[%s1 + $0x38] sm:$0xf]
      %v338 = vld [vmem:[%s1 + $0x3c] sm:$0xff]
      %v339 = vld [vmem:[%s1 + $0x44] sm:$0xf]
      %v340 = vld [vmem:[%s1 + $0x48] sm:$0xff]
      %v341 = vld [vmem:[%s1 + $0x50] sm:$0xf]
      %v342 = vld [vmem:[%s1 + $0x54] sm:$0xff]
      %v343 = vld [vmem:[%s1 + $0x5c] sm:$0xf]
      %v344 = vld [vmem:[%s1 + $0x60] sm:$0xff]
      %v345 = vld [vmem:[%s1 + $0x68] sm:$0xf]
      %v346 = vld [vmem:[%s1 + $0x6c] sm:$0xff]
      %v347 = vld [vmem:[%s1 + $0x74] sm:$0xf]
      %v348 = vld [vmem:[%s1 + $0x78] sm:$0xff]
      %v349 = vld [vmem:[%s1 + $0x80] sm:$0xf]
      %v350 = vld [vmem:[%s1 + $0x84] sm:$0xff]
      %v351 = vld [vmem:[%s1 + $0x8c] sm:$0xf]
      %v352 = vld [vmem:[%s1 + $0x90] sm:$0xff]
      %v353 = vld [vmem:[%s1 + $0x98] sm:$0xf]
      %v354 = vld [vmem:[%s1 + $0x9c] sm:$0xff]
      %v355 = vld [vmem:[%s1 + $0xa4] sm:$0xf]
      %v356 = vld [vmem:[%s1 + $0xa8] sm:$0xff]
      %v357 = vld [vmem:[%s1 + $0xb0] sm:$0xf]
      %v358 = vld [vmem:[%s1 + $0xb4] sm:$0x33]
      %v359 = vld [vmem:[%s1 + $0xbc] sm:$0x3]
      %v360 = vld [vmem:[%s2] sm:$0xff]
      %v361 = vld [vmem:[%s2 + $0x8] sm:$0xff]
      %v362 = vld [vmem:[%s2 + $0x10] sm:$0xff]
      %v363 = vld [vmem:[%s2 + $0x18] sm:$0xff]
      %v364 = vld [vmem:[%s2 + $0x20] sm:$0xff]
      %v365 = vld [vmem:[%s2 + $0x28] sm:$0xff]
      %v366 = vld [vmem:[%s2 + $0x30] sm:$0xff]
      %v367 = vld [vmem:[%s2 + $0x38] sm:$0xff]
      %v368 = vld [vmem:[%s2 + $0x40] sm:$0xff]
      %v369 = vld [vmem:[%s2 + $0x48] sm:$0xff]
      %v370 = vld [vmem:[%s2 + $0x50] sm:$0xff]
      %v371 = vld [vmem:[%s2 + $0x58] sm:$0xff]
      %v372 = vld [vmem:[%s2 + $0x60] sm:$0xff]
      %v373 = vld [vmem:[%s2 + $0x68] sm:$0xff]
      %v374 = vld [vmem:[%s2 + $0x70] sm:$0xff]
      %v375 = vld [vmem:[%s2 + $0x78] sm:$0x7]
      %377 = vset.pattern.permute.xlu0 0
      %378 = vperm.xlu0 %377, %v360
      %v379 = vpop.permute.xlu0 %378
      %382 = vset.pattern.permute.xlu0 0
      %383 = vperm.xlu0 %382, %v361
      %v384 = vpop.permute.xlu0 %383
      %387 = vset.pattern.permute.xlu0 0
      %388 = vperm.xlu0 %387, %v362
      %v389 = vpop.permute.xlu0 %388
      %392 = vset.pattern.permute.xlu0 0
      %393 = vperm.xlu0 %392, %v363
      %v394 = vpop.permute.xlu0 %393
      %397 = vset.pattern.permute.xlu0 0
      %398 = vperm.xlu0 %397, %v364
      %v399 = vpop.permute.xlu0 %398
      %402 = vset.pattern.permute.xlu0 0
      %403 = vperm.xlu0 %402, %v365
      %v404 = vpop.permute.xlu0 %403
      %407 = vset.pattern.permute.xlu0 0
      %408 = vperm.xlu0 %407, %v366
      %v409 = vpop.permute.xlu0 %408
      %412 = vset.pattern.permute.xlu0 0
      %413 = vperm.xlu0 %412, %v367
      %v414 = vpop.permute.xlu0 %413
      %417 = vset.pattern.permute.xlu0 0
      %418 = vperm.xlu0 %417, %v368
      %v419 = vpop.permute.xlu0 %418
      %422 = vset.pattern.permute.xlu0 0
      %423 = vperm.xlu0 %422, %v369
      %v424 = vpop.permute.xlu0 %423
      %427 = vset.pattern.permute.xlu0 0
      %428 = vperm.xlu0 %427, %v370
      %v429 = vpop.permute.xlu0 %428
      %432 = vset.pattern.permute.xlu0 0
      %433 = vperm.xlu0 %432, %v371
      %v434 = vpop.permute.xlu0 %433
      %437 = vset.pattern.permute.xlu0 0
      %438 = vperm.xlu0 %437, %v372
      %v439 = vpop.permute.xlu0 %438
      %442 = vset.pattern.permute.xlu0 0
      %443 = vperm.xlu0 %442, %v373
      %v444 = vpop.permute.xlu0 %443
      %447 = vset.pattern.permute.xlu0 0
      %448 = vperm.xlu0 %447, %v374
      %v449 = vpop.permute.xlu0 %448
      %452 = vset.pattern.permute.xlu0 0
      %453 = vperm.xlu0 %452, %v375
      %v454 = vpop.permute.xlu0 %453
      %v488 = vunpack.c.l.b16 %v328
      %v489 = vunpack.c.h.b16 %v328
      %v490 = vunpack.c.l.b16 %v329
      %v491 = vunpack.c.l.b16 %v330
      %v492 = vunpack.c.h.b16 %v330
      %v493 = vunpack.c.l.b16 %v331
      %v494 = vunpack.c.l.b16 %v332
      %v495 = vunpack.c.h.b16 %v332
      %v496 = vunpack.c.l.b16 %v333
      %v497 = vunpack.c.l.b16 %v334
      %v498 = vunpack.c.h.b16 %v334
      %v499 = vunpack.c.l.b16 %v335
      %v500 = vunpack.c.l.b16 %v336
      %v501 = vunpack.c.h.b16 %v336
      %v502 = vunpack.c.l.b16 %v337
      %v503 = vunpack.c.l.b16 %v338
      %v504 = vunpack.c.h.b16 %v338
      %v505 = vunpack.c.l.b16 %v339
      %v506 = vunpack.c.l.b16 %v340
      %v507 = vunpack.c.h.b16 %v340
      %v508 = vunpack.c.l.b16 %v341
      %v509 = vunpack.c.l.b16 %v342
      %v510 = vunpack.c.h.b16 %v342
      %v511 = vunpack.c.l.b16 %v343
      %v512 = vunpack.c.l.b16 %v344
      %v513 = vunpack.c.h.b16 %v344
      %v514 = vunpack.c.l.b16 %v345
      %v515 = vunpack.c.l.b16 %v346
      %v516 = vunpack.c.h.b16 %v346
      %v517 = vunpack.c.l.b16 %v347
      %v518 = vunpack.c.l.b16 %v348
      %v519 = vunpack.c.h.b16 %v348
      %v520 = vunpack.c.l.b16 %v349
      %v521 = vunpack.c.l.b16 %v350
      %v522 = vunpack.c.h.b16 %v350
      %v523 = vunpack.c.l.b16 %v351
      %v524 = vunpack.c.l.b16 %v352
      %v525 = vunpack.c.h.b16 %v352
      %v526 = vunpack.c.l.b16 %v353
      %v527 = vunpack.c.l.b16 %v354
      %v528 = vunpack.c.h.b16 %v354
      %v529 = vunpack.c.l.b16 %v355
      %v530 = vunpack.c.l.b16 %v356
      %v531 = vunpack.c.h.b16 %v356
      %v532 = vunpack.c.l.b16 %v357
      %v533 = vunpack.c.l.b16 %v358
      %v534 = vunpack.c.h.b16 %v358
      %v535 = vunpack.c.l.b16 %v359
      %v536 = vpack.c.b16 %v491, %v488
      %v537 = vpack.c.b16 %v492, %v489
      %v538 = vpack.c.b16 %v493, %v490
      %v539 = vpack.c.b16 %v497, %v494
      %v540 = vpack.c.b16 %v498, %v495
      %v541 = vpack.c.b16 %v499, %v496
      %v542 = vpack.c.b16 %v503, %v500
      %v543 = vpack.c.b16 %v504, %v501
      %v544 = vpack.c.b16 %v505, %v502
      %v545 = vpack.c.b16 %v509, %v506
      %v546 = vpack.c.b16 %v510, %v507
      %v547 = vpack.c.b16 %v511, %v508
      %v548 = vpack.c.b16 %v515, %v512
      %v549 = vpack.c.b16 %v516, %v513
      %v550 = vpack.c.b16 %v517, %v514
      %v551 = vpack.c.b16 %v521, %v518
      %v552 = vpack.c.b16 %v522, %v519
      %v553 = vpack.c.b16 %v523, %v520
      %v554 = vpack.c.b16 %v527, %v524
      %v555 = vpack.c.b16 %v528, %v525
      %v556 = vpack.c.b16 %v529, %v526
      %v557 = vpack.c.b16 %v533, %v530
      %v558 = vpack.c.b16 %v534, %v531
      %v559 = vpack.c.b16 %v535, %v532
      %vm576 = vcmask 924672
      %v578 = vsel %vm576, %v538, 0
      %v581 = vsel %vm576, %v541, 0
      %v584 = vsel %vm576, %v544, 0
      %v587 = vsel %vm576, %v547, 0
      %v590 = vsel %vm576, %v550, 0
      %v593 = vsel %vm576, %v553, 0
      %v596 = vsel %vm576, %v556, 0
      %v599 = vsel %vm576, %v559, 0
      %vm601 = vcmask 1040384
      %v602 = vsel 0, 4294967295, 65535
      %v603 = vsel %vm601, %v602, 0
      %v605 = vand.u32 %v327, %v603
      %607 = vmatprep.subr.bf16.mxu0 0
      %608 = vmatpush1.bf16.msra.mxu0 %v304
      %609 = vmatprep.subr.bf16.mxu0 0
      %610 = vmatpush1.bf16.msra.mxu0 %v305
      %611 = vmatprep.subr.bf16.mxu0 0
      %612 = vmatpush1.bf16.msra.mxu0 %v306
      %613 = vmatprep.subr.bf16.mxu0 0
      %614 = vmatpush1.bf16.msra.mxu0 %v307
      %615 = vmatprep.subr.bf16.mxu0 0
      %616 = vmatpush1.bf16.msra.mxu0 %v308
      %617 = vmatprep.subr.bf16.mxu0 0
      %618 = vmatpush1.bf16.msra.mxu0 %v309
      %619 = vmatprep.subr.bf16.mxu0 0
      %620 = vmatpush1.bf16.msra.mxu0 %v310
      %621 = vmatprep.subr.bf16.mxu0 0
      %622 = vmatpush1.bf16.msra.mxu0 %v311
      %623 = vmatprep.subr.bf16.mxu0 0
      %624 = vmatpush1.bf16.msra.mxu0 %v312
      %625 = vmatprep.subr.bf16.mxu0 0
      %626 = vmatpush1.bf16.msra.mxu0 %v313
      %627 = vmatprep.subr.bf16.mxu0 0
      %628 = vmatpush1.bf16.msra.mxu0 %v314
      %629 = vmatprep.subr.bf16.mxu0 0
      %630 = vmatpush1.bf16.msra.mxu0 %v315
      %631 = vmatprep.subr.bf16.mxu0 0
      %632 = vmatpush1.bf16.msra.mxu0 %v316
      %633 = vmatprep.subr.bf16.mxu0 0
      %634 = vmatpush1.bf16.msra.mxu0 %v317
      %635 = vmatprep.subr.bf16.mxu0 0
      %636 = vmatpush1.bf16.msra.mxu0 %v318
      %637 = vmatprep.subr.bf16.mxu0 0
      %638 = vmatpush1.bf16.msra.mxu0 %v319
      %639 = vmatprep.mubr.bf16.mxu0 %v537
      %640 = vmatmul.mubr.bf16.gmra.mrb[0].mxu0 %v536
      %v641 = vpop.f32.mrb[0].mxu0
      %v642 = vadd.f32 %v379, %v641
      %v643 = vpop.f32.mrb[0].mxu0
      %v644 = vpop.f32.mrb[0].mxu0
      %v645 = vadd.f32 %v384, %v644
      %v646 = vpop.f32.mrb[0].mxu0
      %647 = vmatprep.mubr.bf16.mxu0 %v540
      %648 = vmatmul.mubr.bf16.gmra.mrb[0].mxu0 %v539
      %v649 = vpop.f32.mrb[0].mxu0
      %v650 = vadd.f32 %v389, %v649
      %v651 = vpop.f32.mrb[0].mxu0
      %v652 = vpop.f32.mrb[0].mxu0
      %v653 = vadd.f32 %v394, %v652
      %v654 = vpop.f32.mrb[0].mxu0
      %655 = vmatprep.mubr.bf16.mxu0 %v543
      %656 = vmatmul.mubr.bf16.gmra.mrb[0].mxu0 %v542
      %v657 = vpop.f32.mrb[0].mxu0
      %v658 = vadd.f32 %v399, %v657
      %v659 = vpop.f32.mrb[0].mxu0
      %v660 = vpop.f32.mrb[0].mxu0
      %v661 = vadd.f32 %v404, %v660
      %v662 = vpop.f32.mrb[0].mxu0
      %663 = vmatprep.mubr.bf16.mxu0 %v546
      %664 = vmatmul.mubr.bf16.gmra.mrb[0].mxu0 %v545
      %v665 = vpop.f32.mrb[0].mxu0
      %v666 = vadd.f32 %v409, %v665
      %v667 = vpop.f32.mrb[0].mxu0
      %v668 = vpop.f32.mrb[0].mxu0
      %v669 = vadd.f32 %v414, %v668
      %v670 = vpop.f32.mrb[0].mxu0
      %671 = vmatprep.mubr.bf16.mxu0 %v549
      %672 = vmatmul.mubr.bf16.gmra.mrb[0].mxu0 %v548
      %v673 = vpop.f32.mrb[0].mxu0
      %v674 = vadd.f32 %v419, %v673
      %v675 = vpop.f32.mrb[0].mxu0
      %v676 = vpop.f32.mrb[0].mxu0
      %v677 = vadd.f32 %v424, %v676
      %v678 = vpop.f32.mrb[0].mxu0
      %679 = vmatprep.mubr.bf16.mxu0 %v552
      %680 = vmatmul.mubr.bf16.gmra.mrb[0].mxu0 %v551
      %v681 = vpop.f32.mrb[0].mxu0
      %v682 = vadd.f32 %v429, %v681
      %v683 = vpop.f32.mrb[0].mxu0
      %v684 = vpop.f32.mrb[0].mxu0
      %v685 = vadd.f32 %v434, %v684
      %v686 = vpop.f32.mrb[0].mxu0
      %687 = vmatprep.mubr.bf16.mxu0 %v555
      %688 = vmatmul.mubr.bf16.gmra.mrb[0].mxu0 %v554
      %v689 = vpop.f32.mrb[0].mxu0
      %v690 = vadd.f32 %v439, %v689
      %v691 = vpop.f32.mrb[0].mxu0
      %v692 = vpop.f32.mrb[0].mxu0
      %v693 = vadd.f32 %v444, %v692
      %v694 = vpop.f32.mrb[0].mxu0
      %695 = vmatprep.mubr.bf16.mxu0 %v558
      %696 = vmatmul.mubr.bf16.gmra.mrb[0].mxu0 %v557
      %v697 = vpop.f32.mrb[0].mxu0
      %v698 = vadd.f32 %v449, %v697
      %v699 = vpop.f32.mrb[0].mxu0
      %v700 = vpop.f32.mrb[0].mxu0
      %v701 = vadd.f32 %v454, %v700
      %v702 = vpop.f32.mrb[0].mxu0
      %703 = vdwg.mxu0
      %704 = vmatprep.subr.bf16.mxu0 0
      %705 = vmatpush1.bf16.msra.mxu0 %v320
      %706 = vmatprep.subr.bf16.mxu0 0
      %707 = vmatpush1.bf16.msra.mxu0 %v321
      %708 = vmatprep.subr.bf16.mxu0 0
      %709 = vmatpush1.bf16.msra.mxu0 %v322
      %710 = vmatprep.subr.bf16.mxu0 0
      %711 = vmatpush1.bf16.msra.mxu0 %v323
      %712 = vmatprep.subr.bf16.mxu0 0
      %713 = vmatpush1.bf16.msra.mxu0 %v324
      %714 = vmatprep.subr.bf16.mxu0 0
      %715 = vmatpush1.bf16.msra.mxu0 %v325
      %716 = vmatprep.subr.bf16.mxu0 0
      %717 = vmatpush1.bf16.msra.mxu0 %v326
      %718 = vmatprep.subr.bf16.mxu0 0
      %719 = vmatpush1.bf16.msra.mxu0 %v605
      %720 = vmatprep.subr.bf16.mxu0 0
      %721 = vmatpush1.bf16.msra.mxu0 0
      %722 = vmatprep.subr.bf16.mxu0 0
      %723 = vmatpush1.bf16.msra.mxu0 0
      %724 = vmatprep.subr.bf16.mxu0 0
      %725 = vmatpush1.bf16.msra.mxu0 0
      %726 = vmatprep.subr.bf16.mxu0 0
      %727 = vmatpush1.bf16.msra.mxu0 0
      %728 = vmatprep.subr.bf16.mxu0 0
      %729 = vmatpush1.bf16.msra.mxu0 0
      %730 = vmatprep.subr.bf16.mxu0 0
      %731 = vmatpush1.bf16.msra.mxu0 0
      %732 = vmatprep.subr.bf16.mxu0 0
      %733 = vmatpush1.bf16.msra.mxu0 0
      %734 = vmatprep.subr.bf16.mxu0 0
      %735 = vmatpush1.bf16.msra.mxu0 0
      %736 = vmatprep.mubr.bf16.mxu0 0
      %737 = vmatmul.mubr.bf16.gmra.mrb[0].mxu0 %v578
      %v738 = vpop.f32.mrb[0].mxu0
      %v739 = vadd.f32 %v642, %v738
      %v740 = vpop.f32.mrb[0].mxu0
      %v741 = vpop.f32.mrb[0].mxu0
      %v742 = vadd.f32 %v645, %v741
      %v743 = vpop.f32.mrb[0].mxu0
      %744 = vmatprep.mubr.bf16.mxu0 0
      %745 = vmatmul.mubr.bf16.gmra.mrb[0].mxu0 %v581
      %v746 = vpop.f32.mrb[0].mxu0
      %v747 = vadd.f32 %v650, %v746
      %v748 = vpop.f32.mrb[0].mxu0
      %v749 = vpop.f32.mrb[0].mxu0
      %v750 = vadd.f32 %v653, %v749
      %v751 = vpop.f32.mrb[0].mxu0
      %752 = vmatprep.mubr.bf16.mxu0 0
      %753 = vmatmul.mubr.bf16.gmra.mrb[0].mxu0 %v584
      %v754 = vpop.f32.mrb[0].mxu0
      %v755 = vadd.f32 %v658, %v754
      %v756 = vpop.f32.mrb[0].mxu0
      %v757 = vpop.f32.mrb[0].mxu0
      %v758 = vadd.f32 %v661, %v757
      %v759 = vpop.f32.mrb[0].mxu0
      %760 = vmatprep.mubr.bf16.mxu0 0
      %761 = vmatmul.mubr.bf16.gmra.mrb[0].mxu0 %v587
      %v762 = vpop.f32.mrb[0].mxu0
      %v763 = vadd.f32 %v666, %v762
      %v764 = vpop.f32.mrb[0].mxu0
      %v765 = vpop.f32.mrb[0].mxu0
      %v766 = vadd.f32 %v669, %v765
      %v767 = vpop.f32.mrb[0].mxu0
      %768 = vmatprep.mubr.bf16.mxu0 0
      %769 = vmatmul.mubr.bf16.gmra.mrb[0].mxu0 %v590
      %v770 = vpop.f32.mrb[0].mxu0
      %v771 = vadd.f32 %v674, %v770
      %v772 = vpop.f32.mrb[0].mxu0
      %v773 = vpop.f32.mrb[0].mxu0
      %v774 = vadd.f32 %v677, %v773
      %v775 = vpop.f32.mrb[0].mxu0
      %776 = vmatprep.mubr.bf16.mxu0 0
      %777 = vmatmul.mubr.bf16.gmra.mrb[0].mxu0 %v593
      %v778 = vpop.f32.mrb[0].mxu0
      %v779 = vadd.f32 %v682, %v778
      %v780 = vpop.f32.mrb[0].mxu0
      %v781 = vpop.f32.mrb[0].mxu0
      %v782 = vadd.f32 %v685, %v781
      %v783 = vpop.f32.mrb[0].mxu0
      %784 = vmatprep.mubr.bf16.mxu0 0
      %785 = vmatmul.mubr.bf16.gmra.mrb[0].mxu0 %v596
      %v786 = vpop.f32.mrb[0].mxu0
      %v787 = vadd.f32 %v690, %v786
      %v788 = vpop.f32.mrb[0].mxu0
      %v789 = vpop.f32.mrb[0].mxu0
      %v790 = vadd.f32 %v693, %v789
      %v791 = vpop.f32.mrb[0].mxu0
      %792 = vmatprep.mubr.bf16.mxu0 0
      %793 = vmatmul.mubr.bf16.gmra.mrb[0].mxu0 %v599
      %v794 = vpop.f32.mrb[0].mxu0
      %v795 = vadd.f32 %v698, %v794
      %v796 = vpop.f32.mrb[0].mxu0
      %v797 = vpop.f32.mrb[0].mxu0
      %v798 = vadd.f32 %v701, %v797
      %v799 = vpop.f32.mrb[0].mxu0
      %800 = vdwg.mxu0
      %v801 = vld [vmem:[%s3] sm:$0xf]
      %v802 = vld [vmem:[%s3 + $0x4] sm:$0xf]
      %v803 = vld [vmem:[%s3 + $0x8] sm:$0xf]
      %v804 = vld [vmem:[%s3 + $0xc] sm:$0xf]
      %v805 = vld [vmem:[%s3 + $0x10] sm:$0xf]
      %v806 = vld [vmem:[%s3 + $0x14] sm:$0xf]
      %v807 = vld [vmem:[%s3 + $0x18] sm:$0xf]
      %v808 = vld [vmem:[%s3 + $0x1c] sm:$0xf]
      %v809 = vld [vmem:[%s3 + $0x20] sm:$0xf]
      %v810 = vld [vmem:[%s3 + $0x24] sm:$0xf]
      %v811 = vld [vmem:[%s3 + $0x28] sm:$0xf]
      %v812 = vld [vmem:[%s3 + $0x2c] sm:$0xf]
      %v813 = vld [vmem:[%s3 + $0x30] sm:$0xf]
      %v814 = vld [vmem:[%s3 + $0x34] sm:$0xf]
      %v815 = vld [vmem:[%s3 + $0x38] sm:$0xf]
      %v816 = vld [vmem:[%s3 + $0x3c] sm:$0xf]
      %v817 = vld [vmem:[%s3 + $0x40] sm:$0xf]
      %v818 = vld [vmem:[%s3 + $0x44] sm:$0xf]
      %v819 = vld [vmem:[%s3 + $0x48] sm:$0xf]
      %v820 = vld [vmem:[%s3 + $0x4c] sm:$0xf]
      %v821 = vld [vmem:[%s3 + $0x50] sm:$0xf]
      %v822 = vld [vmem:[%s3 + $0x54] sm:$0xf]
      %v823 = vld [vmem:[%s3 + $0x58] sm:$0xf]
      %v824 = vld [vmem:[%s3 + $0x5c] sm:$0xf]
      %v825 = vld [vmem:[%s3 + $0x60] sm:$0xf]
      %v826 = vld [vmem:[%s3 + $0x64] sm:$0xf]
      %v827 = vld [vmem:[%s3 + $0x68] sm:$0xf]
      %v828 = vld [vmem:[%s3 + $0x6c] sm:$0xf]
      %v829 = vld [vmem:[%s3 + $0x70] sm:$0xf]
      %v830 = vld [vmem:[%s3 + $0x74] sm:$0xf]
      %v831 = vld [vmem:[%s3 + $0x78] sm:$0xf]
      %v832 = vld [vmem:[%s3 + $0x7c] sm:$0xf]
      %v833 = vld [vmem:[%s3 + $0x80] sm:$0xf]
      %v834 = vld [vmem:[%s3 + $0x84] sm:$0xf]
      %v835 = vld [vmem:[%s3 + $0x88] sm:$0xf]
      %v836 = vld [vmem:[%s3 + $0x8c] sm:$0xf]
      %v837 = vld [vmem:[%s3 + $0x90] sm:$0xf]
      %v838 = vld [vmem:[%s3 + $0x94] sm:$0xf]
      %v839 = vld [vmem:[%s3 + $0x98] sm:$0xf]
      %v840 = vld [vmem:[%s3 + $0x9c] sm:$0xf]
      %v841 = vld [vmem:[%s3 + $0xa0] sm:$0xf]
      %v842 = vld [vmem:[%s3 + $0xa4] sm:$0xf]
      %v843 = vld [vmem:[%s3 + $0xa8] sm:$0xf]
      %v844 = vld [vmem:[%s3 + $0xac] sm:$0xf]
      %v845 = vld [vmem:[%s3 + $0xb0] sm:$0xf]
      %v846 = vld [vmem:[%s3 + $0xb4] sm:$0xf]
      %v847 = vld [vmem:[%s3 + $0xb8] sm:$0x1]
      %v848 = vpack.c.bf16 %v742, %v739
      %v849 = vpack.c.bf16 %v750, %v747
      %v850 = vpack.c.bf16 %v758, %v755
      %v851 = vpack.c.bf16 %v766, %v763
      %v852 = vpack.c.bf16 %v774, %v771
      %v853 = vpack.c.bf16 %v782, %v779
      %v854 = vpack.c.bf16 %v790, %v787
      %v855 = vpack.c.bf16 %v798, %v795
      %v856 = vld [vmem:[%s4] sm:$0xff]
      %v857 = vld [vmem:[%s4 + $0x8] sm:$0xff]
      %v858 = vld [vmem:[%s4 + $0x10] sm:$0xff]
      %v859 = vld [vmem:[%s4 + $0x18] sm:$0xff]
      %v860 = vld [vmem:[%s4 + $0x20] sm:$0xff]
      %v861 = vld [vmem:[%s4 + $0x28] sm:$0xff]
      %v862 = vld [vmem:[%s4 + $0x30] sm:$0xff]
      %v863 = vld [vmem:[%s4 + $0x38] sm:$0xff]
      %v864 = vld [vmem:[%s4 + $0x40] sm:$0xff]
      %v865 = vld [vmem:[%s4 + $0x48] sm:$0xff]
      %v866 = vld [vmem:[%s4 + $0x50] sm:$0xff]
      %v867 = vld [vmem:[%s4 + $0x58] sm:$0xff]
      %v868 = vld [vmem:[%s4 + $0x60] sm:$0xff]
      %v869 = vld [vmem:[%s4 + $0x68] sm:$0xff]
      %v870 = vld [vmem:[%s4 + $0x70] sm:$0xff]
      %v871 = vld [vmem:[%s4 + $0x78] sm:$0xff]
      %v872 = vld [vmem:[%s4 + $0x80] sm:$0xff]
      %v873 = vld [vmem:[%s4 + $0x88] sm:$0xff]
      %v874 = vld [vmem:[%s4 + $0x90] sm:$0xff]
      %v875 = vld [vmem:[%s4 + $0x98] sm:$0xff]
      %v876 = vld [vmem:[%s4 + $0xa0] sm:$0xff]
      %v877 = vld [vmem:[%s4 + $0xa8] sm:$0xff]
      %v878 = vld [vmem:[%s4 + $0xb0] sm:$0xff]
      %v879 = vld [vmem:[%s4 + $0xb8] sm:$0xff]
      %v880 = vld [vmem:[%s4 + $0xc0] sm:$0xff]
      %v881 = vld [vmem:[%s4 + $0xc8] sm:$0xff]
      %v882 = vld [vmem:[%s4 + $0xd0] sm:$0xff]
      %v883 = vld [vmem:[%s4 + $0xd8] sm:$0xff]
      %v884 = vld [vmem:[%s4 + $0xe0] sm:$0xff]
      %v885 = vld [vmem:[%s4 + $0xe8] sm:$0xff]
      %v886 = vld [vmem:[%s4 + $0xf0] sm:$0xff]
      %v887 = vld [vmem:[%s4 + $0xf8] sm:$0xff]
      %v888 = vld [vmem:[%s4 + $0x100] sm:$0xff]
      %v889 = vld [vmem:[%s4 + $0x108] sm:$0xff]
      %v890 = vld [vmem:[%s4 + $0x110] sm:$0xff]
      %v891 = vld [vmem:[%s4 + $0x118] sm:$0xff]
      %v892 = vld [vmem:[%s4 + $0x120] sm:$0xff]
      %v893 = vld [vmem:[%s4 + $0x128] sm:$0xff]
      %v894 = vld [vmem:[%s4 + $0x130] sm:$0xff]
      %v895 = vld [vmem:[%s4 + $0x138] sm:$0xff]
      %v896 = vld [vmem:[%s4 + $0x140] sm:$0xff]
      %v897 = vld [vmem:[%s4 + $0x148] sm:$0xff]
      %v898 = vld [vmem:[%s4 + $0x150] sm:$0xff]
      %v899 = vld [vmem:[%s4 + $0x158] sm:$0xff]
      %v900 = vld [vmem:[%s4 + $0x160] sm:$0xff]
      %v901 = vld [vmem:[%s4 + $0x168] sm:$0xff]
      %v902 = vld [vmem:[%s4 + $0x170] sm:$0x1]
      %904 = vset.pattern.permute.xlu0 0
      %905 = vperm.xlu0 %904, %v856
      %v906 = vpop.permute.xlu0 %905
      %909 = vset.pattern.permute.xlu0 0
      %910 = vperm.xlu0 %909, %v857
      %v911 = vpop.permute.xlu0 %910
      %914 = vset.pattern.permute.xlu0 0
      %915 = vperm.xlu0 %914, %v858
      %v916 = vpop.permute.xlu0 %915
      %919 = vset.pattern.permute.xlu0 0
      %920 = vperm.xlu0 %919, %v859
      %v921 = vpop.permute.xlu0 %920
      %924 = vset.pattern.permute.xlu0 0
      %925 = vperm.xlu0 %924, %v860
      %v926 = vpop.permute.xlu0 %925
      %929 = vset.pattern.permute.xlu0 0
      %930 = vperm.xlu0 %929, %v861
      %v931 = vpop.permute.xlu0 %930
      %934 = vset.pattern.permute.xlu0 0
      %935 = vperm.xlu0 %934, %v862
      %v936 = vpop.permute.xlu0 %935
      %939 = vset.pattern.permute.xlu0 0
      %940 = vperm.xlu0 %939, %v863
      %v941 = vpop.permute.xlu0 %940
      %944 = vset.pattern.permute.xlu0 0
      %945 = vperm.xlu0 %944, %v864
      %v946 = vpop.permute.xlu0 %945
      %949 = vset.pattern.permute.xlu0 0
      %950 = vperm.xlu0 %949, %v865
      %v951 = vpop.permute.xlu0 %950
      %954 = vset.pattern.permute.xlu0 0
      %955 = vperm.xlu0 %954, %v866
      %v956 = vpop.permute.xlu0 %955
      %959 = vset.pattern.permute.xlu0 0
      %960 = vperm.xlu0 %959, %v867
      %v961 = vpop.permute.xlu0 %960
      %964 = vset.pattern.permute.xlu0 0
      %965 = vperm.xlu0 %964, %v868
      %v966 = vpop.permute.xlu0 %965
      %969 = vset.pattern.permute.xlu0 0
      %970 = vperm.xlu0 %969, %v869
      %v971 = vpop.permute.xlu0 %970
      %974 = vset.pattern.permute.xlu0 0
      %975 = vperm.xlu0 %974, %v870
      %v976 = vpop.permute.xlu0 %975
      %979 = vset.pattern.permute.xlu0 0
      %980 = vperm.xlu0 %979, %v871
      %v981 = vpop.permute.xlu0 %980
      %984 = vset.pattern.permute.xlu0 0
      %985 = vperm.xlu0 %984, %v872
      %v986 = vpop.permute.xlu0 %985
      %989 = vset.pattern.permute.xlu0 0
      %990 = vperm.xlu0 %989, %v873
      %v991 = vpop.permute.xlu0 %990
      %994 = vset.pattern.permute.xlu0 0
      %995 = vperm.xlu0 %994, %v874
      %v996 = vpop.permute.xlu0 %995
      %999 = vset.pattern.permute.xlu0 0
      %1000 = vperm.xlu0 %999, %v875
      %v1001 = vpop.permute.xlu0 %1000
      %1004 = vset.pattern.permute.xlu0 0
      %1005 = vperm.xlu0 %1004, %v876
      %v1006 = vpop.permute.xlu0 %1005
      %1009 = vset.pattern.permute.xlu0 0
      %1010 = vperm.xlu0 %1009, %v877
      %v1011 = vpop.permute.xlu0 %1010
      %1014 = vset.pattern.permute.xlu0 0
      %1015 = vperm.xlu0 %1014, %v878
      %v1016 = vpop.permute.xlu0 %1015
      %1019 = vset.pattern.permute.xlu0 0
      %1020 = vperm.xlu0 %1019, %v879
      %v1021 = vpop.permute.xlu0 %1020
      %1024 = vset.pattern.permute.xlu0 0
      %1025 = vperm.xlu0 %1024, %v880
      %v1026 = vpop.permute.xlu0 %1025
      %1029 = vset.pattern.permute.xlu0 0
      %1030 = vperm.xlu0 %1029, %v881
      %v1031 = vpop.permute.xlu0 %1030
      %1034 = vset.pattern.permute.xlu0 0
      %1035 = vperm.xlu0 %1034, %v882
      %v1036 = vpop.permute.xlu0 %1035
      %1039 = vset.pattern.permute.xlu0 0
      %1040 = vperm.xlu0 %1039, %v883
      %v1041 = vpop.permute.xlu0 %1040
      %1044 = vset.pattern.permute.xlu0 0
      %1045 = vperm.xlu0 %1044, %v884
      %v1046 = vpop.permute.xlu0 %1045
      %1049 = vset.pattern.permute.xlu0 0
      %1050 = vperm.xlu0 %1049, %v885
      %v1051 = vpop.permute.xlu0 %1050
      %1054 = vset.pattern.permute.xlu0 0
      %1055 = vperm.xlu0 %1054, %v886
      %v1056 = vpop.permute.xlu0 %1055
      %1059 = vset.pattern.permute.xlu0 0
      %1060 = vperm.xlu0 %1059, %v887
      %v1061 = vpop.permute.xlu0 %1060
      %1064 = vset.pattern.permute.xlu0 0
      %1065 = vperm.xlu0 %1064, %v888
      %v1066 = vpop.permute.xlu0 %1065
      %1069 = vset.pattern.permute.xlu0 0
      %1070 = vperm.xlu0 %1069, %v889
      %v1071 = vpop.permute.xlu0 %1070
      %1074 = vset.pattern.permute.xlu0 0
      %1075 = vperm.xlu0 %1074, %v890
      %v1076 = vpop.permute.xlu0 %1075
      %1079 = vset.pattern.permute.xlu0 0
      %1080 = vperm.xlu0 %1079, %v891
      %v1081 = vpop.permute.xlu0 %1080
      %1084 = vset.pattern.permute.xlu0 0
      %1085 = vperm.xlu0 %1084, %v892
      %v1086 = vpop.permute.xlu0 %1085
      %1089 = vset.pattern.permute.xlu0 0
      %1090 = vperm.xlu0 %1089, %v893
      %v1091 = vpop.permute.xlu0 %1090
      %1094 = vset.pattern.permute.xlu0 0
      %1095 = vperm.xlu0 %1094, %v894
      %v1096 = vpop.permute.xlu0 %1095
      %1099 = vset.pattern.permute.xlu0 0
      %1100 = vperm.xlu0 %1099, %v895
      %v1101 = vpop.permute.xlu0 %1100
      %1104 = vset.pattern.permute.xlu0 0
      %1105 = vperm.xlu0 %1104, %v896
      %v1106 = vpop.permute.xlu0 %1105
      %1109 = vset.pattern.permute.xlu0 0
      %1110 = vperm.xlu0 %1109, %v897
      %v1111 = vpop.permute.xlu0 %1110
      %1114 = vset.pattern.permute.xlu0 0
      %1115 = vperm.xlu0 %1114, %v898
      %v1116 = vpop.permute.xlu0 %1115
      %1119 = vset.pattern.permute.xlu0 0
      %1120 = vperm.xlu0 %1119, %v899
      %v1121 = vpop.permute.xlu0 %1120
      %1124 = vset.pattern.permute.xlu0 0
      %1125 = vperm.xlu0 %1124, %v900
      %v1126 = vpop.permute.xlu0 %1125
      %1129 = vset.pattern.permute.xlu0 0
      %1130 = vperm.xlu0 %1129, %v901
      %v1131 = vpop.permute.xlu0 %1130
      %1134 = vset.pattern.permute.xlu0 0
      %1135 = vperm.xlu0 %1134, %v902
      %v1136 = vpop.permute.xlu0 %1135
      %v1185 = vunpack.c.l.b16 %v801
      %v1186 = vunpack.c.l.b16 %v802
      %v1187 = vunpack.c.l.b16 %v803
      %v1188 = vunpack.c.l.b16 %v804
      %v1189 = vunpack.c.l.b16 %v805
      %v1190 = vunpack.c.l.b16 %v806
      %v1191 = vunpack.c.l.b16 %v807
      %v1192 = vunpack.c.l.b16 %v808
      %v1193 = vunpack.c.l.b16 %v809
      %v1194 = vunpack.c.l.b16 %v810
      %v1195 = vunpack.c.l.b16 %v811
      %v1196 = vunpack.c.l.b16 %v812
      %v1197 = vunpack.c.l.b16 %v813
      %v1198 = vunpack.c.l.b16 %v814
      %v1199 = vunpack.c.l.b16 %v815
      %v1200 = vunpack.c.l.b16 %v816
      %v1201 = vunpack.c.l.b16 %v817
      %v1202 = vunpack.c.l.b16 %v818
      %v1203 = vunpack.c.l.b16 %v819
      %v1204 = vunpack.c.l.b16 %v820
      %v1205 = vunpack.c.l.b16 %v821
      %v1206 = vunpack.c.l.b16 %v822
      %v1207 = vunpack.c.l.b16 %v823
      %v1208 = vunpack.c.l.b16 %v824
      %v1209 = vunpack.c.l.b16 %v825
      %v1210 = vunpack.c.l.b16 %v826
      %v1211 = vunpack.c.l.b16 %v827
      %v1212 = vunpack.c.l.b16 %v828
      %v1213 = vunpack.c.l.b16 %v829
      %v1214 = vunpack.c.l.b16 %v830
      %v1215 = vunpack.c.l.b16 %v831
      %v1216 = vunpack.c.l.b16 %v832
      %v1217 = vunpack.c.l.b16 %v833
      %v1218 = vunpack.c.l.b16 %v834
      %v1219 = vunpack.c.l.b16 %v835
      %v1220 = vunpack.c.l.b16 %v836
      %v1221 = vunpack.c.l.b16 %v837
      %v1222 = vunpack.c.l.b16 %v838
      %v1223 = vunpack.c.l.b16 %v839
      %v1224 = vunpack.c.l.b16 %v840
      %v1225 = vunpack.c.l.b16 %v841
      %v1226 = vunpack.c.l.b16 %v842
      %v1227 = vunpack.c.l.b16 %v843
      %v1228 = vunpack.c.l.b16 %v844
      %v1229 = vunpack.c.l.b16 %v845
      %v1230 = vunpack.c.l.b16 %v846
      %v1231 = vunpack.c.l.b16 %v847
      %v1232 = vpack.c.b16 %v1186, %v1185
      %v1233 = vpack.c.b16 %v1188, %v1187
      %v1234 = vpack.c.b16 %v1190, %v1189
      %v1235 = vpack.c.b16 %v1192, %v1191
      %v1236 = vpack.c.b16 %v1194, %v1193
      %v1237 = vpack.c.b16 %v1196, %v1195
      %v1238 = vpack.c.b16 %v1198, %v1197
      %v1239 = vpack.c.b16 %v1200, %v1199
      %v1240 = vpack.c.b16 %v1202, %v1201
      %v1241 = vpack.c.b16 %v1204, %v1203
      %v1242 = vpack.c.b16 %v1206, %v1205
      %v1243 = vpack.c.b16 %v1208, %v1207
      %v1244 = vpack.c.b16 %v1210, %v1209
      %v1245 = vpack.c.b16 %v1212, %v1211
      %v1246 = vpack.c.b16 %v1214, %v1213
      %v1247 = vpack.c.b16 %v1216, %v1215
      %v1248 = vpack.c.b16 %v1218, %v1217
      %v1249 = vpack.c.b16 %v1220, %v1219
      %v1250 = vpack.c.b16 %v1222, %v1221
      %v1251 = vpack.c.b16 %v1224, %v1223
      %v1252 = vpack.c.b16 %v1226, %v1225
      %v1253 = vpack.c.b16 %v1228, %v1227
      %v1254 = vpack.c.b16 %v1230, %v1229
      %v1255 = vpack.c.b16 %v1231, %v1231
      %vm1256 = vcmask 1006592
      %v1258 = vsel %vm1256, %v1232, 0
      %v1261 = vsel %vm1256, %v1233, 0
      %v1264 = vsel %vm1256, %v1234, 0
      %v1267 = vsel %vm1256, %v1235, 0
      %v1270 = vsel %vm1256, %v1236, 0
      %v1273 = vsel %vm1256, %v1237, 0
      %v1276 = vsel %vm1256, %v1238, 0
      %v1279 = vsel %vm1256, %v1239, 0
      %v1282 = vsel %vm1256, %v1240, 0
      %v1285 = vsel %vm1256, %v1241, 0
      %v1288 = vsel %vm1256, %v1242, 0
      %v1291 = vsel %vm1256, %v1243, 0
      %v1294 = vsel %vm1256, %v1244, 0
      %v1297 = vsel %vm1256, %v1245, 0
      %v1300 = vsel %vm1256, %v1246, 0
      %v1303 = vsel %vm1256, %v1247, 0
      %v1306 = vsel %vm1256, %v1248, 0
      %v1309 = vsel %vm1256, %v1249, 0
      %v1312 = vsel %vm1256, %v1250, 0
      %v1315 = vsel %vm1256, %v1251, 0
      %v1318 = vsel %vm1256, %v1252, 0
      %v1321 = vsel %vm1256, %v1253, 0
      %v1324 = vsel %vm1256, %v1254, 0
      %v1327 = vsel %vm1256, %v1255, 0
      %vm1329 = vcmask 1044480
      %vm1330 = vcmask 1045504
      %v1331 = vsel %vm1329, 4294967295, 65535
      %v1332 = vsel %vm1330, %v1331, 0
      %v1334 = vand.u32 %v855, %v1332
      %1336 = vmatprep.subr.bf16.mxu0 0
      %1337 = vmatpush1.bf16.msra.mxu0 %v848
      %1338 = vmatprep.subr.bf16.mxu0 0
      %1339 = vmatpush1.bf16.msra.mxu0 %v849
      %1340 = vmatprep.subr.bf16.mxu0 0
      %1341 = vmatpush1.bf16.msra.mxu0 %v850
      %1342 = vmatprep.subr.bf16.mxu0 0
      %1343 = vmatpush1.bf16.msra.mxu0 %v851
      %1344 = vmatprep.subr.bf16.mxu0 0
      %1345 = vmatpush1.bf16.msra.mxu0 %v852
      %1346 = vmatprep.subr.bf16.mxu0 0
      %1347 = vmatpush1.bf16.msra.mxu0 %v853
      %1348 = vmatprep.subr.bf16.mxu0 0
      %1349 = vmatpush1.bf16.msra.mxu0 %v854
      %1350 = vmatprep.subr.bf16.mxu0 0
      %1351 = vmatpush1.bf16.msra.mxu0 %v1334
      %1352 = vmatprep.subr.bf16.mxu0 0
      %1353 = vmatpush1.bf16.msra.mxu0 0
      %1354 = vmatprep.subr.bf16.mxu0 0
      %1355 = vmatpush1.bf16.msra.mxu0 0
      %1356 = vmatprep.subr.bf16.mxu0 0
      %1357 = vmatpush1.bf16.msra.mxu0 0
      %1358 = vmatprep.subr.bf16.mxu0 0
      %1359 = vmatpush1.bf16.msra.mxu0 0
      %1360 = vmatprep.subr.bf16.mxu0 0
      %1361 = vmatpush1.bf16.msra.mxu0 0
      %1362 = vmatprep.subr.bf16.mxu0 0
      %1363 = vmatpush1.bf16.msra.mxu0 0
      %1364 = vmatprep.subr.bf16.mxu0 0
      %1365 = vmatpush1.bf16.msra.mxu0 0
      %1366 = vmatprep.subr.bf16.mxu0 0
      %1367 = vmatpush1.bf16.msra.mxu0 0
      %1368 = vmatprep.mubr.bf16.mxu0 0
      %1369 = vmatmul.mubr.bf16.gmra.mrb[0].mxu0 %v1258
      %v1370 = vpop.f32.mrb[0].mxu0
      %v1371 = vadd.f32 %v906, %v1370
      %v1372 = vpop.f32.mrb[0].mxu0
      %v1373 = vpop.f32.mrb[0].mxu0
      %v1374 = vadd.f32 %v911, %v1373
      %v1375 = vpop.f32.mrb[0].mxu0
      %1376 = vmatprep.mubr.bf16.mxu0 0
      %1377 = vmatmul.mubr.bf16.gmra.mrb[0].mxu0 %v1261
      %v1378 = vpop.f32.mrb[0].mxu0
      %v1379 = vadd.f32 %v916, %v1378
      %v1380 = vpop.f32.mrb[0].mxu0
      %v1381 = vpop.f32.mrb[0].mxu0
      %v1382 = vadd.f32 %v921, %v1381
      %v1383 = vpop.f32.mrb[0].mxu0
      %1384 = vmatprep.mubr.bf16.mxu0 0
      %1385 = vmatmul.mubr.bf16.gmra.mrb[0].mxu0 %v1264
      %v1386 = vpop.f32.mrb[0].mxu0
      %v1387 = vadd.f32 %v926, %v1386
      %v1388 = vpop.f32.mrb[0].mxu0
      %v1389 = vpop.f32.mrb[0].mxu0
      %v1390 = vadd.f32 %v931, %v1389
      %v1391 = vpop.f32.mrb[0].mxu0
      %1392 = vmatprep.mubr.bf16.mxu0 0
      %1393 = vmatmul.mubr.bf16.gmra.mrb[0].mxu0 %v1267
      %v1394 = vpop.f32.mrb[0].mxu0
      %v1395 = vadd.f32 %v936, %v1394
      %v1396 = vpop.f32.mrb[0].mxu0
      %v1397 = vpop.f32.mrb[0].mxu0
      %v1398 = vadd.f32 %v941, %v1397
      %v1399 = vpop.f32.mrb[0].mxu0
      %1400 = vmatprep.mubr.bf16.mxu0 0
      %1401 = vmatmul.mubr.bf16.gmra.mrb[0].mxu0 %v1270
      %v1402 = vpop.f32.mrb[0].mxu0
      %v1403 = vadd.f32 %v946, %v1402
      %v1404 = vpop.f32.mrb[0].mxu0
      %v1405 = vpop.f32.mrb[0].mxu0
      %v1406 = vadd.f32 %v951, %v1405
      %v1407 = vpop.f32.mrb[0].mxu0
      %1408 = vmatprep.mubr.bf16.mxu0 0
      %1409 = vmatmul.mubr.bf16.gmra.mrb[0].mxu0 %v1273
      %v1410 = vpop.f32.mrb[0].mxu0
      %v1411 = vadd.f32 %v956, %v1410
      %v1412 = vpop.f32.mrb[0].mxu0
      %v1413 = vpop.f32.mrb[0].mxu0
      %v1414 = vadd.f32 %v961, %v1413
      %v1415 = vpop.f32.mrb[0].mxu0
      %1416 = vmatprep.mubr.bf16.mxu0 0
      %1417 = vmatmul.mubr.bf16.gmra.mrb[0].mxu0 %v1276
      %v1418 = vpop.f32.mrb[0].mxu0
      %v1419 = vadd.f32 %v966, %v1418
      %v1420 = vpop.f32.mrb[0].mxu0
      %v1421 = vpop.f32.mrb[0].mxu0
      %v1422 = vadd.f32 %v971, %v1421
      %v1423 = vpop.f32.mrb[0].mxu0
      %1424 = vmatprep.mubr.bf16.mxu0 0
      %1425 = vmatmul.mubr.bf16.gmra.mrb[0].mxu0 %v1279
      %v1426 = vpop.f32.mrb[0].mxu0
      %v1427 = vadd.f32 %v976, %v1426
      %v1428 = vpop.f32.mrb[0].mxu0
      %v1429 = vpop.f32.mrb[0].mxu0
      %v1430 = vadd.f32 %v981, %v1429
      %v1431 = vpop.f32.mrb[0].mxu0
      %1432 = vmatprep.mubr.bf16.mxu0 0
      %1433 = vmatmul.mubr.bf16.gmra.mrb[0].mxu0 %v1282
      %v1434 = vpop.f32.mrb[0].mxu0
      %v1435 = vadd.f32 %v986, %v1434
      %v1436 = vpop.f32.mrb[0].mxu0
      %v1437 = vpop.f32.mrb[0].mxu0
      %v1438 = vadd.f32 %v991, %v1437
      %v1439 = vpop.f32.mrb[0].mxu0
      %1440 = vmatprep.mubr.bf16.mxu0 0
      %1441 = vmatmul.mubr.bf16.gmra.mrb[0].mxu0 %v1285
      %v1442 = vpop.f32.mrb[0].mxu0
      %v1443 = vadd.f32 %v996, %v1442
      %v1444 = vpop.f32.mrb[0].mxu0
      %v1445 = vpop.f32.mrb[0].mxu0
      %v1446 = vadd.f32 %v1001, %v1445
      %v1447 = vpop.f32.mrb[0].mxu0
      %1448 = vmatprep.mubr.bf16.mxu0 0
      %1449 = vmatmul.mubr.bf16.gmra.mrb[0].mxu0 %v1288
      %v1450 = vpop.f32.mrb[0].mxu0
      %v1451 = vadd.f32 %v1006, %v1450
      %v1452 = vpop.f32.mrb[0].mxu0
      %v1453 = vpop.f32.mrb[0].mxu0
      %v1454 = vadd.f32 %v1011, %v1453
      %v1455 = vpop.f32.mrb[0].mxu0
      %1456 = vmatprep.mubr.bf16.mxu0 0
      %1457 = vmatmul.mubr.bf16.gmra.mrb[0].mxu0 %v1291
      %v1458 = vpop.f32.mrb[0].mxu0
      %v1459 = vadd.f32 %v1016, %v1458
      %v1460 = vpop.f32.mrb[0].mxu0
      %v1461 = vpop.f32.mrb[0].mxu0
      %v1462 = vadd.f32 %v1021, %v1461
      %v1463 = vpop.f32.mrb[0].mxu0
      %1464 = vmatprep.mubr.bf16.mxu0 0
      %1465 = vmatmul.mubr.bf16.gmra.mrb[0].mxu0 %v1294
      %v1466 = vpop.f32.mrb[0].mxu0
      %v1467 = vadd.f32 %v1026, %v1466
      %v1468 = vpop.f32.mrb[0].mxu0
      %v1469 = vpop.f32.mrb[0].mxu0
      %v1470 = vadd.f32 %v1031, %v1469
      %v1471 = vpop.f32.mrb[0].mxu0
      %1472 = vmatprep.mubr.bf16.mxu0 0
      %1473 = vmatmul.mubr.bf16.gmra.mrb[0].mxu0 %v1297
      %v1474 = vpop.f32.mrb[0].mxu0
      %v1475 = vadd.f32 %v1036, %v1474
      %v1476 = vpop.f32.mrb[0].mxu0
      %v1477 = vpop.f32.mrb[0].mxu0
      %v1478 = vadd.f32 %v1041, %v1477
      %v1479 = vpop.f32.mrb[0].mxu0
      %1480 = vmatprep.mubr.bf16.mxu0 0
      %1481 = vmatmul.mubr.bf16.gmra.mrb[0].mxu0 %v1300
      %v1482 = vpop.f32.mrb[0].mxu0
      %v1483 = vadd.f32 %v1046, %v1482
      %v1484 = vpop.f32.mrb[0].mxu0
      %v1485 = vpop.f32.mrb[0].mxu0
      %v1486 = vadd.f32 %v1051, %v1485
      %v1487 = vpop.f32.mrb[0].mxu0
      %1488 = vmatprep.mubr.bf16.mxu0 0
      %1489 = vmatmul.mubr.bf16.gmra.mrb[0].mxu0 %v1303
      %v1490 = vpop.f32.mrb[0].mxu0
      %v1491 = vadd.f32 %v1056, %v1490
      %v1492 = vpop.f32.mrb[0].mxu0
      %v1493 = vpop.f32.mrb[0].mxu0
      %v1494 = vadd.f32 %v1061, %v1493
      %v1495 = vpop.f32.mrb[0].mxu0
      %1496 = vmatprep.mubr.bf16.mxu0 0
      %1497 = vmatmul.mubr.bf16.gmra.mrb[0].mxu0 %v1306
      %v1498 = vpop.f32.mrb[0].mxu0
      %v1499 = vadd.f32 %v1066, %v1498
      %v1500 = vpop.f32.mrb[0].mxu0
      %v1501 = vpop.f32.mrb[0].mxu0
      %v1502 = vadd.f32 %v1071, %v1501
      %v1503 = vpop.f32.mrb[0].mxu0
      %1504 = vmatprep.mubr.bf16.mxu0 0
      %1505 = vmatmul.mubr.bf16.gmra.mrb[0].mxu0 %v1309
      %v1506 = vpop.f32.mrb[0].mxu0
      %v1507 = vadd.f32 %v1076, %v1506
      %v1508 = vpop.f32.mrb[0].mxu0
      %v1509 = vpop.f32.mrb[0].mxu0
      %v1510 = vadd.f32 %v1081, %v1509
      %v1511 = vpop.f32.mrb[0].mxu0
      %1512 = vmatprep.mubr.bf16.mxu0 0
      %1513 = vmatmul.mubr.bf16.gmra.mrb[0].mxu0 %v1312
      %v1514 = vpop.f32.mrb[0].mxu0
      %v1515 = vadd.f32 %v1086, %v1514
      %v1516 = vpop.f32.mrb[0].mxu0
      %v1517 = vpop.f32.mrb[0].mxu0
      %v1518 = vadd.f32 %v1091, %v1517
      %v1519 = vpop.f32.mrb[0].mxu0
      %1520 = vmatprep.mubr.bf16.mxu0 0
      %1521 = vmatmul.mubr.bf16.gmra.mrb[0].mxu0 %v1315
      %v1522 = vpop.f32.mrb[0].mxu0
      %v1523 = vadd.f32 %v1096, %v1522
      %v1524 = vpop.f32.mrb[0].mxu0
      %v1525 = vpop.f32.mrb[0].mxu0
      %v1526 = vadd.f32 %v1101, %v1525
      %v1527 = vpop.f32.mrb[0].mxu0
      %1528 = vmatprep.mubr.bf16.mxu0 0
      %1529 = vmatmul.mubr.bf16.gmra.mrb[0].mxu0 %v1318
      %v1530 = vpop.f32.mrb[0].mxu0
      %v1531 = vadd.f32 %v1106, %v1530
      %v1532 = vpop.f32.mrb[0].mxu0
      %v1533 = vpop.f32.mrb[0].mxu0
      %v1534 = vadd.f32 %v1111, %v1533
      %v1535 = vpop.f32.mrb[0].mxu0
      %1536 = vmatprep.mubr.bf16.mxu0 0
      %1537 = vmatmul.mubr.bf16.gmra.mrb[0].mxu0 %v1321
      %v1538 = vpop.f32.mrb[0].mxu0
      %v1539 = vadd.f32 %v1116, %v1538
      %v1540 = vpop.f32.mrb[0].mxu0
      %v1541 = vpop.f32.mrb[0].mxu0
      %v1542 = vadd.f32 %v1121, %v1541
      %v1543 = vpop.f32.mrb[0].mxu0
      %1544 = vmatprep.mubr.bf16.mxu0 0
      %1545 = vmatmul.mubr.bf16.gmra.mrb[0].mxu0 %v1324
      %v1546 = vpop.f32.mrb[0].mxu0
      %v1547 = vadd.f32 %v1126, %v1546
      %v1548 = vpop.f32.mrb[0].mxu0
      %v1549 = vpop.f32.mrb[0].mxu0
      %v1550 = vadd.f32 %v1131, %v1549
      %v1551 = vpop.f32.mrb[0].mxu0
      %1552 = vmatprep.mubr.bf16.mxu0 0
      %1553 = vmatmul.mubr.bf16.gmra.mrb[0].mxu0 %v1327
      %v1554 = vpop.f32.mrb[0].mxu0
      %v1555 = vadd.f32 %v1136, %v1554
      %v1556 = vpop.f32.mrb[0].mxu0
      %v1557 = vpop.f32.mrb[0].mxu0
      %v1558 = vpop.f32.mrb[0].mxu0
      %1559 = vdwg.mxu0
      %1560 = vst [vmem:[%s255] sm:$0xff] %v1371
      %1561 = vst [vmem:[%s255 + $0x8] sm:$0xff] %v1374
      %1562 = vst [vmem:[%s255 + $0x10] sm:$0xff] %v1379
      %1563 = vst [vmem:[%s255 + $0x18] sm:$0xff] %v1382
      %1564 = vst [vmem:[%s255 + $0x20] sm:$0xff] %v1387
      %1565 = vst [vmem:[%s255 + $0x28] sm:$0xff] %v1390
      %1566 = vst [vmem:[%s255 + $0x30] sm:$0xff] %v1395
      %1567 = vst [vmem:[%s255 + $0x38] sm:$0xff] %v1398
      %1568 = vst [vmem:[%s255 + $0x40] sm:$0xff] %v1403
      %1569 = vst [vmem:[%s255 + $0x48] sm:$0xff] %v1406
      %1570 = vst [vmem:[%s255 + $0x50] sm:$0xff] %v1411
      %1571 = vst [vmem:[%s255 + $0x58] sm:$0xff] %v1414
      %1572 = vst [vmem:[%s255 + $0x60] sm:$0xff] %v1419
      %1573 = vst [vmem:[%s255 + $0x68] sm:$0xff] %v1422
      %1574 = vst [vmem:[%s255 + $0x70] sm:$0xff] %v1427
      %1575 = vst [vmem:[%s255 + $0x78] sm:$0xff] %v1430
      %1576 = vst [vmem:[%s255 + $0x80] sm:$0xff] %v1435
      %1577 = vst [vmem:[%s255 + $0x88] sm:$0xff] %v1438
      %1578 = vst [vmem:[%s255 + $0x90] sm:$0xff] %v1443
      %1579 = vst [vmem:[%s255 + $0x98] sm:$0xff] %v1446
      %1580 = vst [vmem:[%s255 + $0xa0] sm:$0xff] %v1451
      %1581 = vst [vmem:[%s255 + $0xa8] sm:$0xff] %v1454
      %1582 = vst [vmem:[%s255 + $0xb0] sm:$0xff] %v1459
      %1583 = vst [vmem:[%s255 + $0xb8] sm:$0xff] %v1462
      %1584 = vst [vmem:[%s255 + $0xc0] sm:$0xff] %v1467
      %1585 = vst [vmem:[%s255 + $0xc8] sm:$0xff] %v1470
      %1586 = vst [vmem:[%s255 + $0xd0] sm:$0xff] %v1475
      %1587 = vst [vmem:[%s255 + $0xd8] sm:$0xff] %v1478
      %1588 = vst [vmem:[%s255 + $0xe0] sm:$0xff] %v1483
      %1589 = vst [vmem:[%s255 + $0xe8] sm:$0xff] %v1486
      %1590 = vst [vmem:[%s255 + $0xf0] sm:$0xff] %v1491
      %1591 = vst [vmem:[%s255 + $0xf8] sm:$0xff] %v1494
      %1592 = vst [vmem:[%s255 + $0x100] sm:$0xff] %v1499
      %1593 = vst [vmem:[%s255 + $0x108] sm:$0xff] %v1502
      %1594 = vst [vmem:[%s255 + $0x110] sm:$0xff] %v1507
      %1595 = vst [vmem:[%s255 + $0x118] sm:$0xff] %v1510
      %1596 = vst [vmem:[%s255 + $0x120] sm:$0xff] %v1515
      %1597 = vst [vmem:[%s255 + $0x128] sm:$0xff] %v1518
      %1598 = vst [vmem:[%s255 + $0x130] sm:$0xff] %v1523
      %1599 = vst [vmem:[%s255 + $0x138] sm:$0xff] %v1526
      %1600 = vst [vmem:[%s255 + $0x140] sm:$0xff] %v1531
      %1601 = vst [vmem:[%s255 + $0x148] sm:$0xff] %v1534
      %1602 = vst [vmem:[%s255 + $0x150] sm:$0xff] %v1539
      %1603 = vst [vmem:[%s255 + $0x158] sm:$0xff] %v1542
      %1604 = vst [vmem:[%s255 + $0x160] sm:$0xff] %v1547
      %1605 = vst [vmem:[%s255 + $0x168] sm:$0xff] %v1550
      %1606 = vst [vmem:[%s255 + $0x170] sm:$0x1] %v1555
      %p1607 = scmp.lt.s32.totalorder %s20, 1
      %s1608 = scalar_select %p1607, %s20, 1
      %p1609 = scmp.lt.s32.totalorder %s21, 0
      %s1610 = scalar_select %p1609, %s21, 0
      %s1611 = smul.addr %s1608, 47
      %s1612 = sadd.s32 %s1610, %s1611
      %s1613 = smul.addr %s1612, 8
      %s1614 = scalar_lea.vmem %s5, %s1613
      // Predicated region
      $region41: #{tpu_custom_call.1} parent=39 // pred_check
        %p1615 = pneg %p160
      $region42: #{tpu_custom_call.1} parent=39 // pred_check_branch
        %1617 = sbr.rel (%p1615) target = $region44
      $region43: #{tpu_custom_call.1} parent=39 // pred_region
        _
      $region44: #{tpu_custom_call.1} parent=39 // pred_fallthru
        _
    $region40: #{tpu_custom_call.1} parent=5 // pred_fallthru
      _
    %p1618 = scmp.le.s32.totalorder 2, %s11
    // Predicated region
    $region45: #{tpu_custom_call.1} parent=5 // pred_check
      %p1619 = pneg %p1618
    $region46: #{tpu_custom_call.1} parent=5 // pred_check_branch
      %1621 = sbr.rel (%p1619) target = $region48
    $region47: #{tpu_custom_call.1} parent=5 // pred_region
      %s1622 = ssub.s32 %s11, 2
      // Predicated region
      $region49: #{tpu_custom_call.1} parent=47 // pred_check
        %p1623 = pneg %p166
      $region50: #{tpu_custom_call.1} parent=47 // pred_check_branch
        %1625 = sbr.rel (%p1623) target = $region52
      $region51: #{tpu_custom_call.1} parent=47 // pred_region
        %p1626 = scmp.lt.s32.totalorder %s22, 1
        %s1627 = scalar_select %p1626, %s22, 1
        %p1628 = scmp.lt.s32.totalorder %s23, 0
        %s1629 = scalar_select %p1628, %s23, 0
        %s1630 = smul.addr %s1627, 47
        %s1631 = sadd.s32 %s1629, %s1630
        %s1632 = smul.addr %s1631, 8
        %s1633 = scalar_lea.vmem %s5, %s1632
      $region52: #{tpu_custom_call.1} parent=47 // pred_fallthru
        _
    $region48: #{tpu_custom_call.1} parent=5 // pred_fallthru
      _
  $region6: #{tpu_custom_call.1} parent=0 // loop_footer
    %s15 = sadd.s32 1, %s11
  $region7: #{tpu_custom_call.1} parent=0 // loop_footer_branch
    %10 = sbr.rel target = $region3
  $region8: #{tpu_custom_call.1} parent=0 // loop_exit
    _

</llo_original>
